<compile_context>
chip_gen: v7x
topology: tpu7x:2x2x1
jax: 0.10.0
libtpu: 0.0.40
codegen_flags: <defaults>
</compile_context>

<pallas_src>
import functools
import math

import jax
import jax.numpy as jnp
from jax.experimental import pallas as pl
from jax.experimental.pallas import tpu as pltpu


def make_positional_encoding(d_model: int, max_len: int) -> jnp.ndarray:
    """Deterministic sinusoidal table, shape (max_len, 1, d_model) (torch layout)."""
    position = jnp.arange(0, max_len, dtype=jnp.float32)[:, None]          # (max_len, 1)
    div_term = jnp.exp(
        jnp.arange(0, d_model, 2, dtype=jnp.float32)
        * (-math.log(10000.0) / d_model)
    )                                                                       # (ceil(d/2),)
    angles = position * div_term                                            # (max_len, ceil(d/2))
    pe = jnp.zeros((max_len, d_model), dtype=jnp.float32)
    pe = pe.at[:, 0::2].set(jnp.sin(angles))
    pe = pe.at[:, 1::2].set(jnp.cos(angles[:, : d_model // 2]))             # odd d_model safe
    return pe[:, None, :]                                                   # (max_len, 1, d_model)


def _pe_add_kernel(x_ref, pe_ref, o_ref, *, batch: int):
    # x_ref / o_ref: (TILE_S, batch * d_model)   lane-dense 2D slab
    # pe_ref:        (TILE_S, d_model)
    pe = pe_ref[...]
    # Broadcast pe across batch on the VPU (free filler under DMA in this
    # memory-bound kernel), then ONE full-width add + unmasked store.
    pe_b = pe if batch == 1 else jnp.tile(pe, (1, batch))
    o_ref[...] = x_ref[...] + pe_b


def _chip_tuning():
    """Best-effort per-generation (target_tile_bytes, vmem_limit_bytes)."""
    tile_bytes = 2 * 1024 * 1024      # safe under v5e's 16 MiB scoped-VMEM default
    vmem_limit = None
    try:
        kind = jax.devices()[0].device_kind.lower()
    except Exception:
        return tile_bytes, vmem_limit
    if "v6" in kind:
        # 2x4 MiB in + 2x4 MiB out + pe ~ 17 MiB < 32 MiB scoped default.
        tile_bytes = 4 * 1024 * 1024
    elif "v5" in kind:
        tile_bytes = 2 * 1024 * 1024
    elif "7" in kind:                 # v7x: 3.2 TB/s per TC -> amortize step overhead
        tile_bytes = 8 * 1024 * 1024
        vmem_limit = 48 * 1024 * 1024 # > 32 MiB scoped default, < 64 MiB physical
    return tile_bytes, vmem_limit


def _choose_tile_seq(seq: int, row_bytes: int, target_tile_bytes: int) -> int:
    if seq <= 8:
        return seq                    # full (short) seq axis satisfies the (8,128) rule
    t = target_tile_bytes // max(row_bytes, 1)
    t = max(8, min(t, seq))
    t = (t // 8) * 8                  # sublane multiple of 8
    if seq >= 16:
        # Guarantee >=2 grid tiles so v7x's two TensorCores both get work
        # (harmless on single-TC v5e/v6e).
        half = max(8, (seq // 2 // 8) * 8)
        t = min(t, half)
    return t


# Below this many activation bytes, fused XLA elementwise already sits at the
# HBM roofline and the fixed pallas_call / per-step overhead only adds latency.
_SMALL_PROBLEM_BYTES = 1 * 1024 * 1024


def positional_encoding_forward(x: jnp.ndarray, pe: jnp.ndarray,
                                *, training: bool = False,
                                force_kernel: bool = False) -> jnp.ndarray:
    """x: (seq, batch, d_model); pe: (max_len, 1, d_model). Eval-mode forward."""
    if training:
        # TODO(synk): in-kernel dropout mask (pltpu.prng_*) not implemented.
        raise NotImplementedError("dropout is identity here (eval mode only)")

    seq, batch, d_model = x.shape
    flat = batch * d_model
    itemsize = jnp.dtype(x.dtype).itemsize

    # Small-problem fast path (plain XLA), identical semantics.
    if not force_kernel and seq * flat * itemsize < _SMALL_PROBLEM_BYTES:
        return x + pe[:seq].astype(x.dtype)

    # Glue: slice the table, squeeze the degenerate batch axis, match x dtype,
    # and present x as a lane-dense 2D slab (cheap layout plumbing).
    pe2d = pe[:seq, 0, :].astype(x.dtype)            # (seq, d_model)
    x2d = x.reshape(seq, flat)                       # (seq, batch*d_model)

    target_tile_bytes, vmem_limit = _chip_tuning()
    row_bytes = flat * itemsize
    tile_s = _choose_tile_seq(seq, row_bytes, target_tile_bytes)
    grid = (pl.cdiv(seq, tile_s),)

    cp_kwargs = dict(dimension_semantics=("parallel",))
    if vmem_limit is not None:
        cp_kwargs["vmem_limit_bytes"] = vmem_limit

    out2d = pl.pallas_call(
        functools.partial(_pe_add_kernel, batch=batch),
        out_shape=jax.ShapeDtypeStruct((seq, flat), x.dtype),
        grid_spec=pltpu.PrefetchScalarGridSpec(
            num_scalar_prefetch=0,
            grid=grid,
            in_specs=[
                pl.BlockSpec((tile_s, flat), lambda i: (i, 0)),
                pl.BlockSpec((tile_s, d_model), lambda i: (i, 0)),
            ],
            out_specs=pl.BlockSpec((tile_s, flat), lambda i: (i, 0)),
        ),
        compiler_params=pltpu.CompilerParams(**cp_kwargs),
        # Pure elementwise update: let the output reuse x's HBM buffer.
        input_output_aliases={0: 0},
    )(x2d, pe2d)

    return out2d.reshape(seq, batch, d_model)


if __name__ == "__main__":
    d_model = 32
    max_len = 16

    pe = make_positional_encoding(d_model, max_len)
    key = jax.random.PRNGKey(0)
    k1, k2 = jax.random.split(key)

    # Case 1: (seq=8, batch=2, d_model=32) forced through the Pallas kernel.
    x1 = jax.random.normal(k1, (8, 2, d_model), dtype=jnp.float32)
    ref1 = x1 + pe[:8]                                   # computed before any aliasing call
    out1 = jax.block_until_ready(positional_encoding_forward(x1, pe, force_kernel=True))
    assert out1.shape == (8, 2, d_model)
    assert jnp.allclose(out1, ref1, atol=1e-6), "kernel mismatch vs reference (case 1)"

    # Case 2: (seq=16, batch=4) -> 2-tile grid, exercises the seq grid / tiling.
    x2 = jax.random.normal(k2, (16, 4, d_model), dtype=jnp.float32)
    ref2 = x2 + pe[:16]
    out2 = jax.block_until_ready(positional_encoding_forward(x2, pe, force_kernel=True))
    assert out2.shape == (16, 4, d_model)
    assert jnp.allclose(out2, ref2, atol=1e-6), "kernel mismatch vs reference (case 2)"

    # Case 3: small-problem fast path (plain XLA), identical semantics.
    out3 = jax.block_until_ready(positional_encoding_forward(x1, pe))
    assert jnp.allclose(out3, ref1, atol=1e-6), "fast-path mismatch vs reference"

    print("KERNEL_OK")
</pallas_src>

<mosaic_0001>
module attributes {stable_mosaic.version = 11 : i64} {
  func.func @_pe_add_kernel(%arg0: i32, %arg1: memref<8x64xf32, #tpu.memory_space<vmem>>, %arg2: memref<8x32xf32, #tpu.memory_space<vmem>>, %arg3: memref<8x64xf32, #tpu.memory_space<vmem>>) attributes {dimension_semantics = [#tpu.dimension_semantics<parallel>], iteration_bounds = array<i64: 1>, scalar_prefetch = 0 : i64, scratch_operands = 0 : i64, tpu.core_type = #tpu.core_type<tc>, window_params = [{transform_indices = @transform_0, window_bounds = array<i64: 8, 64>}, {transform_indices = @transform_1, window_bounds = array<i64: 8, 32>}, {transform_indices = @transform_2, window_bounds = array<i64: 8, 64>}]} {
    %c0 = arith.constant 0 : index
    %c0_0 = arith.constant 0 : index
    %0 = vector.load %arg2[%c0, %c0_0] : memref<8x32xf32, #tpu.memory_space<vmem>>, vector<8x32xf32>
    %1 = tpu.concatenate %0, %0 in 1 : vector<8x32xf32>, vector<8x32xf32> -> vector<8x64xf32>
    %c0_1 = arith.constant 0 : index
    %c0_2 = arith.constant 0 : index
    %2 = vector.load %arg1[%c0_1, %c0_2] : memref<8x64xf32, #tpu.memory_space<vmem>>, vector<8x64xf32>
    %3 = arith.addf %2, %1 : vector<8x64xf32>
    %c0_3 = arith.constant 0 : index
    %c0_4 = arith.constant 0 : index
    %4 = vector.load %arg3[%c0_3, %c0_4] : memref<8x64xf32, #tpu.memory_space<vmem>>, vector<8x64xf32>
    tpu.vector_store %arg3[%c0_3, %c0_4], %3 {strides = array<i32>} : memref<8x64xf32, #tpu.memory_space<vmem>>, vector<8x64xf32>,
    return
  }
  func.func @transform_0(%arg0: i32) -> (i32, i32) {
    %c0_i32 = arith.constant 0 : i32
    %c0_i32_0 = arith.constant 0 : i32
    return %arg0, %c0_i32 : i32, i32
  }
  func.func @transform_1(%arg0: i32) -> (i32, i32) {
    %c0_i32 = arith.constant 0 : i32
    %c0_i32_0 = arith.constant 0 : i32
    return %arg0, %c0_i32 : i32, i32
  }
  func.func @transform_2(%arg0: i32) -> (i32, i32) {
    %c0_i32 = arith.constant 0 : i32
    %c0_i32_0 = arith.constant 0 : i32
    return %arg0, %c0_i32 : i32, i32
  }
}

</mosaic_0001>

<llo_original>
// kernel: tpu_custom_call.1
$region0: #{tpu_custom_call.1}
  #allocation0 [shape = 'u32[]', space=smem, size = 0x4, offset = 0x4, fixed_abs, tag = 'smem constant byte address 0x4 - core index']
  #allocation1 [shape = 'u32[144,128]{1,0:T(1,128)}', space=vmem, size = 0x12000, scoped, tag = 'internal scratch']
  %s0 = inlined_call_operand.hbm [shape: f32[8,64], index: 0, kind: input, shape index: {}, may-alias: {0,2}]
  %s1 = inlined_call_operand.vmem [shape: f32[8,32], index: 1, kind: input, shape index: {}]
  %s2 = inlined_call_operand.hbm [shape: f32[8,64], index: 2, kind: output, shape index: {}, may-alias: {0,2}]
  %s3 = sld [smem:[#allocation0]]
  $region22: #{tpu_custom_call.1} parent=0
    _
  %s5 = ssub.s32 1, %s3
  %s6 = scalar_select 0, %s5, %s3
  $region1: #{tpu_custom_call.1} parent=0
    #allocation2 [shape = 'u8[4096]{0}', space=vmem, size = 0x1000, scoped, tag = 'input window, operand 0, single buffered']
    #allocation3 [shape = 's32[1]{0}', space=sflag, size = 0x4, scoped, tag = 'scoped memory for tpu_custom_call.1']
    #allocation4 [shape = 's32[1]{0}', space=sflag, size = 0x4, scoped, tag = 'scoped memory for tpu_custom_call.1']
    #allocation5 [shape = 'u8[4096]{0}', space=vmem, size = 0x1000, scoped, tag = 'output window, operand 0, single buffered']
    %7 = vsyncpa [#allocation3], 0
    %8 = vsyncpa [#allocation4], 0
    // Predicated region
    $region2: #{tpu_custom_call.1} parent=1 // pred_check
      _
    $region3: #{tpu_custom_call.1} parent=1 // pred_check_branch
      %10 = sbr.rel (0) target = $region5
    $region4: #{tpu_custom_call.1} parent=1 // pred_region
      %s12 = ssub.s32 128, 128
      %13 = vsyncadd [#allocation3], %s12
      %s15 = sshll.u32 [#allocation2], 4
      %s16 = int_to_ptr.vmem [resolvable:$true] %s15
      %18 = dma.hbm_to_vmem [thread:$0]  %s0, 128, %s16, [#allocation3]
    $region5: #{tpu_custom_call.1} parent=1 // pred_fallthru
      _
    // Predicated region
    $region6: #{tpu_custom_call.1} parent=1 // pred_check
      _
    $region7: #{tpu_custom_call.1} parent=1 // pred_check_branch
      %20 = sbr.rel (0) target = $region9
    $region8: #{tpu_custom_call.1} parent=1 // pred_region
      _
    $region9: #{tpu_custom_call.1} parent=1 // pred_fallthru
      _
    // Predicated region
    $region10: #{tpu_custom_call.1} parent=1 // pred_check
      _
    $region11: #{tpu_custom_call.1} parent=1 // pred_check_branch
      %22 = sbr.rel (0) target = $region13
    $region12: #{tpu_custom_call.1} parent=1 // pred_region
      %23 = dma.done [#allocation3], 128
    $region13: #{tpu_custom_call.1} parent=1 // pred_fallthru
      _
    %v24 = vld [vmem:[%s1] sm:$0xff]
    %26 = vrot.lane.b32.xlu0 %v24, 32
    %v27 = vpop.permute.xlu0 %26
    %vm29 = vcmask 261120
    %v30 = vsel %vm29, %v24, %v27
    %v31 = vld [vmem:[#allocation2] sm:$0xff]
    %v32 = vadd.f32 %v31, %v30
    %vm33 = vcmask 523264
    %34 = vst.msk [vmem:[#allocation5] sm:$0xff] %vm33, %v32
    // Predicated region
    $region14: #{tpu_custom_call.1} parent=1 // pred_check
      _
    $region15: #{tpu_custom_call.1} parent=1 // pred_check_branch
      %36 = sbr.rel (0) target = $region17
    $region16: #{tpu_custom_call.1} parent=1 // pred_region
      %s38 = ssub.s32 128, 128
      %39 = vsyncadd [#allocation4], %s38
      %s41 = sshll.u32 [#allocation5], 4
      %s42 = int_to_ptr.vmem [resolvable:$true] %s41
      %44 = dma.vmem_to_hbm [thread:$0]  %s42, 128, %s2, [#allocation4]
    $region17: #{tpu_custom_call.1} parent=1 // pred_fallthru
      _
    // Predicated region
    $region18: #{tpu_custom_call.1} parent=1 // pred_check
      _
    $region19: #{tpu_custom_call.1} parent=1 // pred_check_branch
      %46 = sbr.rel (0) target = $region21
    $region20: #{tpu_custom_call.1} parent=1 // pred_region
      %47 = dma.done [#allocation4], 128
    $region21: #{tpu_custom_call.1} parent=1 // pred_fallthru
      _
    %48 = vsyncpa [#allocation3], 1
    %49 = vsyncpa [#allocation4], 1

</llo_original>
